<compile_context>
chip_gen: v5e
topology: v5e:2x2
jax: 0.10.0
libtpu: 0.0.40
codegen_flags: <defaults>
</compile_context>

<pallas_src>
import jax
import jax.numpy as jnp
from jax import lax
from jax.experimental import pallas as pl
from jax.experimental.pallas import tpu as pltpu


def _round_up(x, m):
    return ((x + m - 1) // m) * m


def _sublane_min(dtype):
    """Second-minor tile minimum: 8 for 4-byte, 16 for 2-byte, 32 for 1-byte dtypes."""
    itemsize = jnp.dtype(dtype).itemsize
    return max(8, 32 // itemsize)


def _normed_linear_kernel(x_ref, w_ref, invw_ref, o_ref, acc_ref, xsq_ref):
    """Grid (i, j, k): i over batch rows, j over out_features, k over in_features."""
    j = pl.program_id(1)
    k = pl.program_id(2)

    x = x_ref[...]                                   # (tm, tk), native dtype
    w = w_ref[...]                                   # (tk, tn), native dtype

    # Row sum-of-squares of x (f32): computed only on the first j block of each
    # i block and reused for every later j (scratch persists across grid steps;
    # the j axis is marked "arbitrary" so all j for a given i run on one core).
    @pl.when(jnp.logical_and(j == 0, k == 0))
    def _():
        xsq_ref[...] = jnp.zeros_like(xsq_ref)

    @pl.when(j == 0)
    def _():
        xf = x.astype(jnp.float32)
        xsq_ref[...] += jnp.sum(xf * xf, axis=1, keepdims=True)   # (tm, 1)

    # Raw (un-normalized) matmul on the MXU with an f32 accumulator.
    partial = jnp.dot(x, w, preferred_element_type=jnp.float32)

    @pl.when(k == 0)
    def _():
        acc_ref[...] = partial          # assign (saves a zero-init store)

    @pl.when(k > 0)
    def _():
        acc_ref[...] += partial

    @pl.when(k == pl.num_programs(2) - 1)
    def _():
        eps = 1e-12
        # 1 / max(||v||, eps) == rsqrt(max(sum(v^2), eps^2))  (sqrt is monotone).
        inv_x = lax.rsqrt(jnp.maximum(xsq_ref[...], eps * eps))   # (tm, 1)
        o_ref[...] = (acc_ref[...] * inv_x * invw_ref[...]).astype(o_ref.dtype)


def normed_linear(x, weight, *, inv_w=None, tm=None, tn=None, tk=None,
                  mxu_dtype=None, out_dtype=jnp.float32):
    """x: (N, Cin), weight: (Cin, Cout) -> (N, Cout) cosine-similarity logits.

    inv_w: optional precomputed (1, Cout) f32 column inverse-norms of `weight`
           (cache it across calls for a static weight to skip the extra W pass).
    mxu_dtype: optionally cast x / weight (e.g. jnp.bfloat16) for the MXU on
           v6e/v7x; norms and accumulation stay f32.
    """
    N, Cin = x.shape
    Cin_w, Cout = weight.shape
    assert Cin == Cin_w, (Cin, Cin_w)

    # Column inverse-norms of the weight: computed once per weight (cacheable by
    # the caller), removing all per-call w-norm VPU work from the kernel.
    if inv_w is None:
        wf = weight.astype(jnp.float32)
        inv_w = lax.rsqrt(jnp.maximum(jnp.sum(wf * wf, axis=0, keepdims=True),
                                      jnp.float32(1e-24)))        # (1, Cout)
    inv_w = jnp.asarray(inv_w, jnp.float32).reshape(1, Cout)

    # Optional bf16 MXU operands (also halves W HBM bytes on v6e/v7x).
    if mxu_dtype is not None:
        x = x.astype(mxu_dtype)
        weight = weight.astype(mxu_dtype)

    sub_x = _sublane_min(x.dtype)

    # Tile sizes: full-K and wide-N by default so typical ResNet heads have a
    # single (j, k) block -> weight stays VMEM-resident across batch tiles and
    # there is no per-k accumulator writeback.  Worst-case default budget
    # (tm=256, tk=2048, tn=1024, f32) ~23 MiB double-buffered -> fits v7x too.
    if tk is None:
        tk = min(2048, _round_up(Cin, 128))
    if tn is None:
        tn = min(1024, _round_up(Cout, 128))   # large heads land on 256-multiples
    if tm is None:
        tm = min(256, _round_up(N, sub_x))
        # Give the "parallel" i axis a second block when the batch allows it
        # (keeps both v7x TensorCores busy); costs ~one extra grid step.
        if _round_up(N, tm) // tm < 2 and N > sub_x:
            tm = _round_up((N + 1) // 2, sub_x)
    tm = _round_up(tm, sub_x)
    tk = _round_up(tk, 128)
    tn = _round_up(tn, 128)

    # Zero-pad to exact tile multiples (zeros are exact for the dot and the
    # squared norms; inv_w is padded with zeros so padded output cols are 0).
    Mp = _round_up(N, tm)
    Kp = _round_up(Cin, tk)
    Np = _round_up(Cout, tn)
    if (Mp, Kp) != (N, Cin):
        x = jnp.pad(x, ((0, Mp - N), (0, Kp - Cin)))
    if (Kp, Np) != (Cin, Cout):
        weight = jnp.pad(weight, ((0, Kp - Cin), (0, Np - Cout)))
    if Np != Cout:
        inv_w = jnp.pad(inv_w, ((0, 0), (0, Np - Cout)))

    grid = (Mp // tm, Np // tn, Kp // tk)

    out = pl.pallas_call(
        _normed_linear_kernel,
        out_shape=jax.ShapeDtypeStruct((Mp, Np), out_dtype),
        grid_spec=pltpu.PrefetchScalarGridSpec(
            num_scalar_prefetch=0,
            grid=grid,
            in_specs=[
                pl.BlockSpec((tm, tk), lambda i, j, k: (i, k)),
                pl.BlockSpec((tk, tn), lambda i, j, k: (k, j)),
                pl.BlockSpec((1, tn), lambda i, j, k: (0, j)),
            ],
            out_specs=pl.BlockSpec((tm, tn), lambda i, j, k: (i, j)),
            scratch_shapes=[
                pltpu.VMEM((tm, tn), jnp.float32),   # matmul accumulator
                pltpu.VMEM((tm, 1), jnp.float32),    # row sum-of-squares of x
            ],
        ),
        compiler_params=pltpu.CompilerParams(
            # j must stay "arbitrary": the x-norm is computed only at j == 0 and
            # reused by later j blocks on the same core.  i is megacore-parallel.
            dimension_semantics=("parallel", "arbitrary", "arbitrary"),
            vmem_limit_bytes=64 * 1024 * 1024,
        ),
    )(x, weight, inv_w)

    return out[:N, :Cout]


def init_normed_linear_weight(key, in_features, out_features):
    """Replica of: torch.Tensor(in,out).uniform_(-1,1).renorm_(2,1,1e-05).mul_(1e5)."""
    w = jax.random.uniform(
        key, (in_features, out_features), minval=-1.0, maxval=1.0,
        dtype=jnp.float32,
    )
    maxnorm = 1e-05
    col_norm = jnp.sqrt(jnp.sum(w * w, axis=0, keepdims=True))
    scale = jnp.where(col_norm > maxnorm, maxnorm / (col_norm + 1e-7), 1.0)
    return w * scale * 100000.0


def normed_linear_ref(x, weight):
    eps = 1e-12
    xn = x / jnp.maximum(jnp.sqrt(jnp.sum(x * x, axis=1, keepdims=True)), eps)
    wn = weight / jnp.maximum(jnp.sqrt(jnp.sum(weight * weight, axis=0, keepdims=True)), eps)
    return xn @ wn


if __name__ == "__main__":
    key = jax.random.PRNGKey(0)
    k_w, k_x, k_w2, k_x2 = jax.random.split(key, 4)

    # 1) Small shape consistent with the ResNet NormedLinear head (single block).
    batch, cin, cout = 8, 32, 128
    weight = init_normed_linear_weight(k_w, cin, cout)
    x = jax.random.normal(k_x, (batch, cin), dtype=jnp.float32)
    out = jax.block_until_ready(normed_linear(x, weight))
    ref = normed_linear_ref(x, weight)
    assert out.shape == (batch, cout)
    assert jnp.allclose(out, ref, atol=1e-5, rtol=1e-5), "mismatch vs reference (small)"

    # 2) Shape exercising the tiled (i, j, k) grid, K-accumulation, the j == 0
    #    x-norm dedup across multiple j blocks, and padding on every axis.
    batch2, cin2, cout2 = 21, 500, 250
    weight2 = init_normed_linear_weight(k_w2, cin2, cout2)
    x2 = jax.random.normal(k_x2, (batch2, cin2), dtype=jnp.float32)
    out2 = jax.block_until_ready(normed_linear(x2, weight2, tm=8, tn=128, tk=256))
    ref2 = normed_linear_ref(x2, weight2)
    assert out2.shape == (batch2, cout2)
    assert jnp.allclose(out2, ref2, atol=1e-4, rtol=1e-4), "mismatch vs reference (tiled)"

    # 3) bf16-MXU variant (v6e/v7x fast path); norms stay f32, looser tolerance.
    out3 = jax.block_until_ready(normed_linear(x, weight, mxu_dtype=jnp.bfloat16))
    assert out3.shape == (batch, cout)
    assert jnp.allclose(out3, ref, atol=5e-2, rtol=5e-2), "mismatch vs reference (bf16)"

    print("KERNEL_OK")
</pallas_src>

<mosaic_0001>
module attributes {stable_mosaic.version = 11 : i64} {
  func.func @_normed_linear_kernel(%arg0: i32, %arg1: i32, %arg2: i32, %arg3: memref<8x128xf32, #tpu.memory_space<vmem>>, %arg4: memref<128x128xf32, #tpu.memory_space<vmem>>, %arg5: memref<1x128xf32, #tpu.memory_space<vmem>>, %arg6: memref<8x128xf32, #tpu.memory_space<vmem>>, %arg7: memref<8x128xf32, #tpu.memory_space<vmem>>, %arg8: memref<8x1xf32, #tpu.memory_space<vmem>>) attributes {dimension_semantics = [#tpu.dimension_semantics<parallel>, #tpu.dimension_semantics<arbitrary>, #tpu.dimension_semantics<arbitrary>], iteration_bounds = array<i64: 1, 1, 1>, scalar_prefetch = 0 : i64, scratch_operands = 2 : i64, tpu.core_type = #tpu.core_type<tc>, window_params = [{transform_indices = @transform_0, window_bounds = array<i64: 8, 128>}, {transform_indices = @transform_1, window_bounds = array<i64: 128, 128>}, {transform_indices = @transform_2, window_bounds = array<i64: 1, 128>}, {transform_indices = @transform_3, window_bounds = array<i64: 8, 128>}]} {
    %c0 = arith.constant 0 : index
    %c0_0 = arith.constant 0 : index
    %0 = vector.load %arg3[%c0, %c0_0] : memref<8x128xf32, #tpu.memory_space<vmem>>, vector<8x128xf32>
    %c0_1 = arith.constant 0 : index
    %c0_2 = arith.constant 0 : index
    %1 = vector.load %arg4[%c0_1, %c0_2] : memref<128x128xf32, #tpu.memory_space<vmem>>, vector<128x128xf32>
    %c0_i32 = arith.constant 0 : i32
    %2 = arith.cmpi eq, %arg1, %c0_i32 : i32
    %c0_i32_3 = arith.constant 0 : i32
    %3 = arith.cmpi eq, %arg2, %c0_i32_3 : i32
    %4 = arith.andi %2, %3 : i1
    %5 = arith.extui %4 : i1 to i32
    %c0_i32_4 = arith.constant 0 : i32
    %6 = arith.cmpi ne, %5, %c0_i32_4 : i32
    scf.if %6 {
      %cst_13 = arith.constant 0.000000e+00 : f32
      %20 = vector.broadcast %cst_13 : f32 to vector<8x1xf32>
      %c0_14 = arith.constant 0 : index
      %c0_15 = arith.constant 0 : index
      %21 = vector.load %arg8[%c0_14, %c0_15] : memref<8x1xf32, #tpu.memory_space<vmem>>, vector<8x1xf32>
      tpu.vector_store %arg8[%c0_14, %c0_15], %20 {strides = array<i32>} : memref<8x1xf32, #tpu.memory_space<vmem>>, vector<8x1xf32>,
    } else {
    }
    %c0_i32_5 = arith.constant 0 : i32
    %7 = arith.cmpi eq, %arg1, %c0_i32_5 : i32
    %8 = arith.extui %7 : i1 to i32
    %c0_i32_6 = arith.constant 0 : i32
    %9 = arith.cmpi ne, %8, %c0_i32_6 : i32
    scf.if %9 {
      %c0_13 = arith.constant 0 : index
      %c0_14 = arith.constant 0 : index
      %20 = vector.load %arg8[%c0_13, %c0_14] : memref<8x1xf32, #tpu.memory_space<vmem>>, vector<8x1xf32>
      %21 = arith.mulf %0, %0 : vector<8x128xf32>
      %cst_15 = arith.constant dense<0.000000e+00> : vector<8xf32>
      %22 = vector.multi_reduction <add>, %21, %cst_15 [1] : vector<8x128xf32> to vector<8xf32>
      %23 = vector.shape_cast %22 : vector<8xf32> to vector<8x1xf32>
      %24 = arith.addf %20, %23 : vector<8x1xf32>
      %c0_16 = arith.constant 0 : index
      %c0_17 = arith.constant 0 : index
      %25 = vector.load %arg8[%c0_16, %c0_17] : memref<8x1xf32, #tpu.memory_space<vmem>>, vector<8x1xf32>
      tpu.vector_store %arg8[%c0_16, %c0_17], %24 {strides = array<i32>} : memref<8x1xf32, #tpu.memory_space<vmem>>, vector<8x1xf32>,
    } else {
    }
    %cst = arith.constant dense<0.000000e+00> : vector<8x128xf32>
    %10 = tpu.matmul %0, %1, %cst {dimension_numbers = #tpu.dot_dimension_numbers<[1], [0], [0], [1], [0, 0, 1, 1], [], []>} : vector<8x128xf32>, vector<128x128xf32>, vector<8x128xf32> -> vector<8x128xf32>
    %c0_i32_7 = arith.constant 0 : i32
    %11 = arith.cmpi eq, %arg2, %c0_i32_7 : i32
    %12 = arith.extui %11 : i1 to i32
    %c0_i32_8 = arith.constant 0 : i32
    %13 = arith.cmpi ne, %12, %c0_i32_8 : i32
    scf.if %13 {
      %c0_13 = arith.constant 0 : index
      %c0_14 = arith.constant 0 : index
      %20 = vector.load %arg7[%c0_13, %c0_14] : memref<8x128xf32, #tpu.memory_space<vmem>>, vector<8x128xf32>
      tpu.vector_store %arg7[%c0_13, %c0_14], %10 {strides = array<i32>} : memref<8x128xf32, #tpu.memory_space<vmem>>, vector<8x128xf32>,
    } else {
    }
    %c0_i32_9 = arith.constant 0 : i32
    %14 = arith.cmpi sgt, %arg2, %c0_i32_9 : i32
    %15 = arith.extui %14 : i1 to i32
    %c0_i32_10 = arith.constant 0 : i32
    %16 = arith.cmpi ne, %15, %c0_i32_10 : i32
    scf.if %16 {
      %c0_13 = arith.constant 0 : index
      %c0_14 = arith.constant 0 : index
      %20 = vector.load %arg7[%c0_13, %c0_14] : memref<8x128xf32, #tpu.memory_space<vmem>>, vector<8x128xf32>
      %21 = arith.addf %20, %10 : vector<8x128xf32>
      %c0_15 = arith.constant 0 : index
      %c0_16 = arith.constant 0 : index
      %22 = vector.load %arg7[%c0_15, %c0_16] : memref<8x128xf32, #tpu.memory_space<vmem>>, vector<8x128xf32>
      tpu.vector_store %arg7[%c0_15, %c0_16], %21 {strides = array<i32>} : memref<8x128xf32, #tpu.memory_space<vmem>>, vector<8x128xf32>,
    } else {
    }
    %c0_i32_11 = arith.constant 0 : i32
    %17 = arith.cmpi eq, %arg2, %c0_i32_11 : i32
    %18 = arith.extui %17 : i1 to i32
    %c0_i32_12 = arith.constant 0 : i32
    %19 = arith.cmpi ne, %18, %c0_i32_12 : i32
    scf.if %19 {
      %c0_13 = arith.constant 0 : index
      %c0_14 = arith.constant 0 : index
      %20 = vector.load %arg8[%c0_13, %c0_14] : memref<8x1xf32, #tpu.memory_space<vmem>>, vector<8x1xf32>
      %cst_15 = arith.constant 1.000000e-24 : f32
      %21 = vector.broadcast %cst_15 : f32 to vector<8x1xf32>
      %22 = arith.maximumf %20, %21 : vector<8x1xf32>
      %23 = math.rsqrt %22 : vector<8x1xf32>
      %c0_16 = arith.constant 0 : index
      %c0_17 = arith.constant 0 : index
      %24 = vector.load %arg7[%c0_16, %c0_17] : memref<8x128xf32, #tpu.memory_space<vmem>>, vector<8x128xf32>
      %25 = vector.broadcast %23 : vector<8x1xf32> to vector<8x128xf32>
      %26 = arith.mulf %24, %25 : vector<8x128xf32>
      %c0_18 = arith.constant 0 : index
      %c0_19 = arith.constant 0 : index
      %27 = vector.load %arg5[%c0_18, %c0_19] : memref<1x128xf32, #tpu.memory_space<vmem>>, vector<1x128xf32>
      %28 = vector.broadcast %27 : vector<1x128xf32> to vector<8x128xf32>
      %29 = arith.mulf %26, %28 : vector<8x128xf32>
      %c0_20 = arith.constant 0 : index
      %c0_21 = arith.constant 0 : index
      %30 = vector.load %arg6[%c0_20, %c0_21] : memref<8x128xf32, #tpu.memory_space<vmem>>, vector<8x128xf32>
      tpu.vector_store %arg6[%c0_20, %c0_21], %29 {strides = array<i32>} : memref<8x128xf32, #tpu.memory_space<vmem>>, vector<8x128xf32>,
    } else {
    }
    return
  }
  func.func @transform_0(%arg0: i32, %arg1: i32, %arg2: i32) -> (i32, i32) {
    %c0_i32 = arith.constant 0 : i32
    return %arg0, %arg2 : i32, i32
  }
  func.func @transform_1(%arg0: i32, %arg1: i32, %arg2: i32) -> (i32, i32) {
    %c0_i32 = arith.constant 0 : i32
    return %arg2, %arg1 : i32, i32
  }
  func.func @transform_2(%arg0: i32, %arg1: i32, %arg2: i32) -> (i32, i32) {
    %c0_i32 = arith.constant 0 : i32
    %c0_i32_0 = arith.constant 0 : i32
    return %c0_i32, %arg1 : i32, i32
  }
  func.func @transform_3(%arg0: i32, %arg1: i32, %arg2: i32) -> (i32, i32) {
    %c0_i32 = arith.constant 0 : i32
    return %arg0, %arg1 : i32, i32
  }
}

</mosaic_0001>

<llo_original>
// kernel: tpu_custom_call.1
$region0: #{tpu_custom_call.1}
  #allocation0 [shape = 'u32[]', space=smem, size = 0x4, offset = 0x4, fixed_abs, tag = 'smem constant byte address 0x4 - core index']
  #allocation1 [shape = 'u32[72,128]{1,0:T(1,128)}', space=vmem, size = 0x9000, scoped, tag = 'internal scratch']
  #allocation2 [shape = 'f32[8,128]{1,0:T(8,128)}', space=vmem, size = 0x1000, scoped, tag = 'scratch operand']
  #allocation3 [shape = 'f32[8,1]{1,0:T(8,128)}', space=vmem, size = 0x1000, scoped, tag = 'scratch operand']
  %s0 = inlined_call_operand.hbm [shape: f32[8,128], index: 0, kind: input, shape index: {}]
  %s1 = inlined_call_operand.hbm [shape: f32[128,128], index: 1, kind: input, shape index: {}]
  %s2 = inlined_call_operand.vmem [shape: f32[1,128], index: 2, kind: input, shape index: {}]
  %s3 = inlined_call_operand.hbm [shape: f32[8,128], index: 3, kind: output, shape index: {}]
  %s4 = sld [smem:[#allocation0]]
  $region50: #{tpu_custom_call.1} parent=0
    _
  %s6 = ssub.s32 1, %s4
  %s7 = scalar_select 0, %s6, %s4
  $region1: #{tpu_custom_call.1} parent=0
    #allocation4 [shape = 'u8[4096]{0}', space=vmem, size = 0x1000, scoped, tag = 'input window, operand 0, single buffered']
    #allocation5 [shape = 's32[1]{0}', space=sflag, size = 0x4, scoped, tag = 'scoped memory for tpu_custom_call.1']
    #allocation6 [shape = 's32[1]{0}', space=sflag, size = 0x4, scoped, tag = 'scoped memory for tpu_custom_call.1']
    #allocation7 [shape = 'u8[65536]{0}', space=vmem, size = 0x10000, scoped, tag = 'input window, operand 1, single buffered']
    #allocation8 [shape = 's32[1]{0}', space=sflag, size = 0x4, scoped, tag = 'scoped memory for tpu_custom_call.1']
    #allocation9 [shape = 'u8[4096]{0}', space=vmem, size = 0x1000, scoped, tag = 'output window, operand 0, single buffered']
    %8 = vsyncpa [#allocation5], 0
    %9 = vsyncpa [#allocation8], 0
    %10 = vsyncpa [#allocation6], 0
    // Predicated region
    $region2: #{tpu_custom_call.1} parent=1 // pred_check
      _
    $region3: #{tpu_custom_call.1} parent=1 // pred_check_branch
      %12 = sbr.rel (0) target = $region5
    $region4: #{tpu_custom_call.1} parent=1 // pred_region
      %14 = vsyncadd [#allocation5], 0
      %s16 = sshll.u32 %s0, 4
      %s17 = int_to_ptr.hbm [resolvable:$true] %s16
      %s18 = sshll.u32 [#allocation4], 4
      %s19 = int_to_ptr.vmem [resolvable:$true] %s18
      %21 = dma.hbm_to_vmem [thread:$0]  %s17, 128, %s19, [#allocation5]
    $region5: #{tpu_custom_call.1} parent=1 // pred_fallthru
      _
    // Predicated region
    $region6: #{tpu_custom_call.1} parent=1 // pred_check
      _
    $region7: #{tpu_custom_call.1} parent=1 // pred_check_branch
      %23 = sbr.rel (0) target = $region9
    $region8: #{tpu_custom_call.1} parent=1 // pred_region
      %25 = vsyncadd [#allocation8], 0
      %s26 = sshll.u32 %s1, 4
      %s27 = int_to_ptr.hbm [resolvable:$true] %s26
      %s28 = sshll.u32 [#allocation7], 4
      %s29 = int_to_ptr.vmem [resolvable:$true] %s28
      %34 = dma.hbm_to_vmem [thread:$0]  %s27, 2048, %s29, [#allocation8], 128, 128, 8
    $region9: #{tpu_custom_call.1} parent=1 // pred_fallthru
      _
    // Predicated region
    $region10: #{tpu_custom_call.1} parent=1 // pred_check
      _
    $region11: #{tpu_custom_call.1} parent=1 // pred_check_branch
      %36 = sbr.rel (0) target = $region13
    $region12: #{tpu_custom_call.1} parent=1 // pred_region
      _
    $region13: #{tpu_custom_call.1} parent=1 // pred_fallthru
      _
    // Predicated region
    $region14: #{tpu_custom_call.1} parent=1 // pred_check
      _
    $region15: #{tpu_custom_call.1} parent=1 // pred_check_branch
      %38 = sbr.rel (0) target = $region17
    $region16: #{tpu_custom_call.1} parent=1 // pred_region
      %40 = dma.done [#allocation5], 128
    $region17: #{tpu_custom_call.1} parent=1 // pred_fallthru
      _
    // Predicated region
    $region18: #{tpu_custom_call.1} parent=1 // pred_check
      _
    $region19: #{tpu_custom_call.1} parent=1 // pred_check_branch
      %42 = sbr.rel (0) target = $region21
    $region20: #{tpu_custom_call.1} parent=1 // pred_region
      %44 = dma.done [#allocation8], 2048
    $region21: #{tpu_custom_call.1} parent=1 // pred_fallthru
      _
    %v45 = vld [vmem:[#allocation4] sm:$0xff]
    %v46 = vld [vmem:[#allocation7] sm:$0xff]
    %v47 = vld [vmem:[#allocation7 + $0x8] sm:$0xff]
    %v48 = vld [vmem:[#allocation7 + $0x10] sm:$0xff]
    %v49 = vld [vmem:[#allocation7 + $0x18] sm:$0xff]
    %v50 = vld [vmem:[#allocation7 + $0x20] sm:$0xff]
    %v51 = vld [vmem:[#allocation7 + $0x28] sm:$0xff]
    %v52 = vld [vmem:[#allocation7 + $0x30] sm:$0xff]
    %v53 = vld [vmem:[#allocation7 + $0x38] sm:$0xff]
    %v54 = vld [vmem:[#allocation7 + $0x40] sm:$0xff]
    %v55 = vld [vmem:[#allocation7 + $0x48] sm:$0xff]
    %v56 = vld [vmem:[#allocation7 + $0x50] sm:$0xff]
    %v57 = vld [vmem:[#allocation7 + $0x58] sm:$0xff]
    %v58 = vld [vmem:[#allocation7 + $0x60] sm:$0xff]
    %v59 = vld [vmem:[#allocation7 + $0x68] sm:$0xff]
    %v60 = vld [vmem:[#allocation7 + $0x70] sm:$0xff]
    %v61 = vld [vmem:[#allocation7 + $0x78] sm:$0xff]
    %p62 = scmp.eq.s32.totalorder 0, 0
    %p63 = scmp.eq.s32.totalorder 0, 0
    %p64 = pnand %p62, %p63
    %p65 = pneg %p64
    // Predicated region
    $region22: #{tpu_custom_call.1} parent=1 // pred_check
      _
    $region23: #{tpu_custom_call.1} parent=1 // pred_check_branch
      %67 = sbr.rel (%p64) target = $region25
    $region24: #{tpu_custom_call.1} parent=1 // pred_region
      %vm68 = vcmask 7168
      %69 = vst.msk [vmem:[#allocation3] sm:$0xff] %vm68, 0.0
    $region25: #{tpu_custom_call.1} parent=1 // pred_fallthru
      _
    // Predicated region
    $region26: #{tpu_custom_call.1} parent=1 // pred_check
      %p70 = pneg %p62
    $region27: #{tpu_custom_call.1} parent=1 // pred_check_branch
      %72 = sbr.rel (%p70) target = $region29
    $region28: #{tpu_custom_call.1} parent=1 // pred_region
      %v73 = vld [vmem:[#allocation3] sm:$0xff]
      %v74 = vmul.f32 %v45, %v45
      %75 = vadd.xlane.f32.xlu0 %v74
      %v76 = vpop.xlane.xlu0 %75
      %v77 = vadd.f32 %v73, %v76
      %vm78 = vcmask 7168
      %79 = vst.msk [vmem:[#allocation3] sm:$0xff] %vm78, %v77
    $region29: #{tpu_custom_call.1} parent=1 // pred_fallthru
      _
    %80 = vmatpush.msra.mxu0 %v61
    %81 = vmatpush.msra.mxu0 %v60
    %82 = vmatpush.msra.mxu0 %v59
    %83 = vmatpush.msra.mxu0 %v58
    %84 = vmatpush.msra.mxu0 %v57
    %85 = vmatpush.msra.mxu0 %v56
    %86 = vmatpush.msra.mxu0 %v55
    %87 = vmatpush.msra.mxu0 %v54
    %88 = vmatpush.msra.mxu0 %v53
    %89 = vmatpush.msra.mxu0 %v52
    %90 = vmatpush.msra.mxu0 %v51
    %91 = vmatpush.msra.mxu0 %v50
    %92 = vmatpush.msra.mxu0 %v49
    %93 = vmatpush.msra.mxu0 %v48
    %94 = vmatpush.msra.mxu0 %v47
    %95 = vmatpush.msra.mxu0 %v46
    %96 = vmatmul.f32.gmra.mxu0 %v45
    %v97 = vpop.f32.mrf.mxu0
    %v98 = vadd.f32 0.0, %v97
    %99 = vdwg.mxu0
    // Predicated region
    $region30: #{tpu_custom_call.1} parent=1 // pred_check
      %p100 = pneg %p63
    $region31: #{tpu_custom_call.1} parent=1 // pred_check_branch
      %102 = sbr.rel (%p100) target = $region33
    $region32: #{tpu_custom_call.1} parent=1 // pred_region
      %103 = vst [vmem:[#allocation2] sm:$0xff] %v98
    $region33: #{tpu_custom_call.1} parent=1 // pred_fallthru
      _
    %p104 = scmp.gt.s32.totalorder 0, 0
    // Predicated region
    $region34: #{tpu_custom_call.1} parent=1 // pred_check
      %p105 = pneg %p104
    $region35: #{tpu_custom_call.1} parent=1 // pred_check_branch
      %107 = sbr.rel (%p105) target = $region37
    $region36: #{tpu_custom_call.1} parent=1 // pred_region
      %v108 = vld [vmem:[#allocation2] sm:$0xff]
      %v109 = vadd.f32 %v108, %v98
      %110 = vst [vmem:[#allocation2] sm:$0xff] %v109
    $region37: #{tpu_custom_call.1} parent=1 // pred_fallthru
      _
    // Predicated region
    $region38: #{tpu_custom_call.1} parent=1 // pred_check
      %p111 = pneg %p63
    $region39: #{tpu_custom_call.1} parent=1 // pred_check_branch
      %113 = sbr.rel (%p111) target = $region41
    $region40: #{tpu_custom_call.1} parent=1 // pred_region
      %v114 = vld [vmem:[#allocation3] sm:$0xff]
      %v115 = vmax.f32 %v114, 1e-24
      %v116 = vrsqrt.pop %v115
      %v117 = vmul.f32 %v116, %v115
      %v118 = vmul.f32 %v117, %v116
      %v119 = vmul.f32 0.5, %v118
      %v120 = vsub.f32 1.5, %v119
      %v121 = vmul.f32 %v116, %v120
      %vm122 = vweird.f32 %v115
      %vm123 = vweird.f32 %v116
      %vm124 = vmor %vm122, %vm123
      %v125 = vsel %vm124, %v116, %v121
      %v126 = vld [vmem:[#allocation2] sm:$0xff]
      %128 = vset.pattern.permute.xlu0 0
      %129 = vperm.xlu0 %128, %v125
      %v130 = vpop.permute.xlu0 %129
      %v132 = vmul.f32 %v126, %v130
      %v133 = vld [vmem:[%s2] sm:$0x1]
      %v135 = vperm.slane %v133, 0
      %v137 = vmul.f32 %v132, %v135
      %138 = vst [vmem:[#allocation9] sm:$0xff] %v137
    $region41: #{tpu_custom_call.1} parent=1 // pred_fallthru
      _
    // Predicated region
    $region42: #{tpu_custom_call.1} parent=1 // pred_check
      _
    $region43: #{tpu_custom_call.1} parent=1 // pred_check_branch
      %140 = sbr.rel (0) target = $region45
    $region44: #{tpu_custom_call.1} parent=1 // pred_region
      %142 = vsyncadd [#allocation6], 0
      %s144 = sshll.u32 [#allocation9], 4
      %s145 = int_to_ptr.vmem [resolvable:$true] %s144
      %s146 = sshll.u32 %s3, 4
      %s147 = int_to_ptr.hbm [resolvable:$true] %s146
      %149 = dma.vmem_to_hbm [thread:$0]  %s145, 128, %s147, [#allocation6]
    $region45: #{tpu_custom_call.1} parent=1 // pred_fallthru
      _
    // Predicated region
    $region46: #{tpu_custom_call.1} parent=1 // pred_check
      _
    $region47: #{tpu_custom_call.1} parent=1 // pred_check_branch
      %151 = sbr.rel (0) target = $region49
    $region48: #{tpu_custom_call.1} parent=1 // pred_region
      %153 = dma.done [#allocation6], 128
    $region49: #{tpu_custom_call.1} parent=1 // pred_fallthru
      _
    %154 = vsyncpa [#allocation5], 1
    %155 = vsyncpa [#allocation8], 1
    %156 = vsyncpa [#allocation6], 1

</llo_original>
